<compile_context>
chip_gen: v6e
topology: v6e:2x2x1
jax: 0.10.0
libtpu: 0.0.40
codegen_flags: <defaults>
</compile_context>

<pallas_src>
import jax
import jax.numpy as jnp
from jax.experimental import pallas as pl
from jax.experimental.pallas import tpu as pltpu

D_IN, D_H, D_OUT = 150, 64, 3


def _mlp_kernel(x_ref, w1_ref, b1_ref, w2_ref, b2_ref, w3_ref, b3_ref, o_ref):
    compute_dtype = w1_ref.dtype  # bf16 (or f32 on the full-precision path)

    # In-kernel cast of the streamed x tile (no extra HBM pass in the wrapper).
    x = x_ref[...].astype(compute_dtype)

    # h1 = relu(x @ W1 + b1) -- bf16 operands, f32 MXU accumulate, f32 VPU math.
    h1 = jnp.dot(x, w1_ref[...], preferred_element_type=jnp.float32)
    h1 = jnp.maximum(h1 + b1_ref[...], 0.0)

    # h2 = relu(h1 @ W2 + b2)
    h2 = jnp.dot(h1.astype(compute_dtype), w2_ref[...],
                 preferred_element_type=jnp.float32)
    h2 = jnp.maximum(h2 + b2_ref[...], 0.0)

    # out = h2 @ W3 + b3   (no activation)
    out = jnp.dot(h2.astype(compute_dtype), w3_ref[...],
                  preferred_element_type=jnp.float32) + b3_ref[...]
    o_ref[...] = out.astype(o_ref.dtype)


def regression_model_forward(x, params, *, block_b=2048, use_bf16=True):
    """x: (B, 150) float32 -> (B, 3) float32."""
    w1, b1, w2, b2, w3, b3 = params
    B = x.shape[0]

    ceil_to = lambda v, m: -(-v // m) * m

    # Batch tile: multiple of 8 (sublane), capped at block_b.
    tb = min(block_b, ceil_to(B, 8))
    tb = max(8, (tb // 8) * 8)
    n_blocks = -(-B // tb)
    if n_blocks == 1 and B > 8:
        # Prefer >= 2 grid steps so the "parallel" batch axis can feed both
        # v7x TensorCores.
        tb = max(8, ceil_to(-(-B // 2), 8))
        n_blocks = -(-B // tb)

    compute_dtype = jnp.bfloat16 if use_bf16 else x.dtype
    w1_c = w1.astype(compute_dtype)
    w2_c = w2.astype(compute_dtype)
    w3_c = w3.astype(compute_dtype)
    # Biases stay f32: added post-accumulate on the VPU.

    # Scoped-VMEM estimate: double-buffered x tile (lanes pad 150->256),
    # double-buffered output tile (lanes pad 3->128), resident weights/biases.
    lane = lambda n: ceil_to(n, 128)
    wd_bytes = jnp.dtype(compute_dtype).itemsize
    vmem_est = (2 * tb * lane(D_IN) * x.dtype.itemsize
                + 2 * tb * lane(D_OUT) * 4
                + (ceil_to(D_IN, 8) * lane(D_H) + D_H * lane(D_H)
                   + D_H * lane(D_OUT)) * wd_bytes
                + 3 * 8 * 128 * 4)
    compiler_kwargs = dict(dimension_semantics=("parallel",))
    if vmem_est > (14 << 20):
        # Raise the scoped-VMEM limit (v5e default is only 16 MiB) while
        # staying comfortably below v7x's 64 MiB physical VMEM.
        compiler_kwargs["vmem_limit_bytes"] = min(48 << 20, int(1.5 * vmem_est))

    rows = n_blocks * tb
    cost = pl.CostEstimate(
        flops=2 * rows * (D_IN * D_H + D_H * D_H + D_H * D_OUT),
        transcendentals=0,
        bytes_accessed=(B * D_IN * x.dtype.itemsize           # x stream
                        + B * D_OUT * 4                        # output
                        + (D_IN * D_H + D_H * D_H + D_H * D_OUT) * wd_bytes
                        + (2 * D_H + D_OUT) * 4),              # biases
    )

    const = lambda shape: pl.BlockSpec(shape, lambda i: tuple(0 for _ in shape))

    out = pl.pallas_call(
        _mlp_kernel,
        out_shape=jax.ShapeDtypeStruct((B, D_OUT), jnp.float32),
        grid=(n_blocks,),
        in_specs=[
            pl.BlockSpec((tb, D_IN), lambda i: (i, 0)),   # x: streamed, f32
            const((D_IN, D_H)),                           # W1 (VMEM-resident)
            const((1, D_H)),                              # b1
            const((D_H, D_H)),                            # W2
            const((1, D_H)),                              # b2
            const((D_H, D_OUT)),                          # W3
            const((1, D_OUT)),                            # b3
        ],
        out_specs=pl.BlockSpec((tb, D_OUT), lambda i: (i, 0)),
        compiler_params=pltpu.CompilerParams(**compiler_kwargs),
        cost_estimate=cost,
    )(x, w1_c, b1, w2_c, b2, w3_c, b3)

    # Partial last block is handled by Pallas masked stores; no slice needed.
    return out


def init_params(key):
    """Deterministic init mimicking nn.Linear's uniform(-1/sqrt(fan_in), ...)."""
    ks = jax.random.split(key, 6)

    def linear(kw, kb, fan_in, fan_out):
        bound = 1.0 / jnp.sqrt(jnp.float32(fan_in))
        w = jax.random.uniform(kw, (fan_in, fan_out), jnp.float32, -bound, bound)
        b = jax.random.uniform(kb, (1, fan_out), jnp.float32, -bound, bound)
        return w, b

    w1, b1 = linear(ks[0], ks[1], D_IN, D_H)
    w2, b2 = linear(ks[2], ks[3], D_H, D_H)
    w3, b3 = linear(ks[4], ks[5], D_H, D_OUT)
    return (w1, b1, w2, b2, w3, b3)


def reference_forward(x, params, *, use_bf16=True):
    """Pure-JAX reference with dtype handling matching the kernel."""
    w1, b1, w2, b2, w3, b3 = params
    cd = jnp.bfloat16 if use_bf16 else x.dtype
    h1 = jnp.maximum(
        jnp.dot(x.astype(cd), w1.astype(cd),
                preferred_element_type=jnp.float32) + b1, 0.0)
    h2 = jnp.maximum(
        jnp.dot(h1.astype(cd), w2.astype(cd),
                preferred_element_type=jnp.float32) + b2, 0.0)
    return jnp.dot(h2.astype(cd), w3.astype(cd),
                   preferred_element_type=jnp.float32) + b3


if __name__ == "__main__":
    key = jax.random.PRNGKey(0)
    k_params, k_x = jax.random.split(key)
    params = init_params(k_params)

    # Small demo batch; B=200 (not a multiple of the tile) exercises a 2-step
    # pipelined grid plus the implicit partial-last-block masked-store path.
    B = 200
    x = jax.random.normal(k_x, (B, D_IN), jnp.float32)

    # Full-precision path (tight tolerance).
    out_f32 = regression_model_forward(x, params, use_bf16=False)
    out_f32 = jax.block_until_ready(out_f32)
    ref_f32 = reference_forward(x, params, use_bf16=False)
    assert out_f32.shape == (B, D_OUT)
    assert jnp.allclose(out_f32, ref_f32, atol=1e-4, rtol=1e-4), "f32 mismatch"

    # bf16 compute path (production setting; f32 accumulate, f32 x in HBM).
    out_bf16 = regression_model_forward(x, params, use_bf16=True)
    out_bf16 = jax.block_until_ready(out_bf16)
    ref_bf16 = reference_forward(x, params, use_bf16=True)
    assert out_bf16.shape == (B, D_OUT)
    assert jnp.allclose(out_bf16, ref_bf16, atol=1e-2, rtol=1e-2), "bf16 mismatch"

    print("KERNEL_OK")
</pallas_src>

<mosaic_0001>
module attributes {stable_mosaic.version = 11 : i64} {
  func.func @_mlp_kernel(%arg0: i32, %arg1: memref<104x150xf32, #tpu.memory_space<vmem>>, %arg2: memref<150x64xf32, #tpu.memory_space<vmem>>, %arg3: memref<1x64xf32, #tpu.memory_space<vmem>>, %arg4: memref<64x64xf32, #tpu.memory_space<vmem>>, %arg5: memref<1x64xf32, #tpu.memory_space<vmem>>, %arg6: memref<64x3xf32, #tpu.memory_space<vmem>>, %arg7: memref<1x3xf32, #tpu.memory_space<vmem>>, %arg8: memref<104x3xf32, #tpu.memory_space<vmem>>) attributes {dimension_semantics = [#tpu.dimension_semantics<parallel>], iteration_bounds = array<i64: 2>, scalar_prefetch = 0 : i64, scratch_operands = 0 : i64, tpu.core_type = #tpu.core_type<tc>, window_params = [{transform_indices = @transform_0, window_bounds = array<i64: 104, 150>}, {pipeline_mode = #tpu.pipeline_mode<synchronous>, transform_indices = @transform_1, window_bounds = array<i64: 150, 64>}, {pipeline_mode = #tpu.pipeline_mode<synchronous>, transform_indices = @transform_2, window_bounds = array<i64: 1, 64>}, {pipeline_mode = #tpu.pipeline_mode<synchronous>, transform_indices = @transform_3, window_bounds = array<i64: 64, 64>}, {pipeline_mode = #tpu.pipeline_mode<synchronous>, transform_indices = @transform_4, window_bounds = array<i64: 1, 64>}, {pipeline_mode = #tpu.pipeline_mode<synchronous>, transform_indices = @transform_5, window_bounds = array<i64: 64, 3>}, {pipeline_mode = #tpu.pipeline_mode<synchronous>, transform_indices = @transform_6, window_bounds = array<i64: 1, 3>}, {transform_indices = @transform_7, window_bounds = array<i64: 104, 3>}]} {
    %c0 = arith.constant 0 : index
    %c0_0 = arith.constant 0 : index
    %0 = vector.load %arg1[%c0, %c0_0] : memref<104x150xf32, #tpu.memory_space<vmem>>, vector<104x150xf32>
    %c0_1 = arith.constant 0 : index
    %c0_2 = arith.constant 0 : index
    %1 = vector.load %arg2[%c0_1, %c0_2] : memref<150x64xf32, #tpu.memory_space<vmem>>, vector<150x64xf32>
    %cst = arith.constant dense<0.000000e+00> : vector<104x64xf32>
    %2 = tpu.matmul %0, %1, %cst {dimension_numbers = #tpu.dot_dimension_numbers<[1], [0], [0], [1], [0, 0, 1, 1], [], []>} : vector<104x150xf32>, vector<150x64xf32>, vector<104x64xf32> -> vector<104x64xf32>
    %c0_3 = arith.constant 0 : index
    %c0_4 = arith.constant 0 : index
    %3 = vector.load %arg3[%c0_3, %c0_4] : memref<1x64xf32, #tpu.memory_space<vmem>>, vector<1x64xf32>
    %4 = vector.broadcast %3 : vector<1x64xf32> to vector<104x64xf32>
    %5 = arith.addf %2, %4 : vector<104x64xf32>
    %cst_5 = arith.constant 0.000000e+00 : f32
    %6 = vector.broadcast %cst_5 : f32 to vector<104x64xf32>
    %7 = arith.maximumf %5, %6 : vector<104x64xf32>
    %c0_6 = arith.constant 0 : index
    %c0_7 = arith.constant 0 : index
    %8 = vector.load %arg4[%c0_6, %c0_7] : memref<64x64xf32, #tpu.memory_space<vmem>>, vector<64x64xf32>
    %cst_8 = arith.constant dense<0.000000e+00> : vector<104x64xf32>
    %9 = tpu.matmul %7, %8, %cst_8 {dimension_numbers = #tpu.dot_dimension_numbers<[1], [0], [0], [1], [0, 0, 1, 1], [], []>} : vector<104x64xf32>, vector<64x64xf32>, vector<104x64xf32> -> vector<104x64xf32>
    %c0_9 = arith.constant 0 : index
    %c0_10 = arith.constant 0 : index
    %10 = vector.load %arg5[%c0_9, %c0_10] : memref<1x64xf32, #tpu.memory_space<vmem>>, vector<1x64xf32>
    %11 = vector.broadcast %10 : vector<1x64xf32> to vector<104x64xf32>
    %12 = arith.addf %9, %11 : vector<104x64xf32>
    %cst_11 = arith.constant 0.000000e+00 : f32
    %13 = vector.broadcast %cst_11 : f32 to vector<104x64xf32>
    %14 = arith.maximumf %12, %13 : vector<104x64xf32>
    %c0_12 = arith.constant 0 : index
    %c0_13 = arith.constant 0 : index
    %15 = vector.load %arg6[%c0_12, %c0_13] : memref<64x3xf32, #tpu.memory_space<vmem>>, vector<64x3xf32>
    %cst_14 = arith.constant dense<0.000000e+00> : vector<104x3xf32>
    %16 = tpu.matmul %14, %15, %cst_14 {dimension_numbers = #tpu.dot_dimension_numbers<[1], [0], [0], [1], [0, 0, 1, 1], [], []>} : vector<104x64xf32>, vector<64x3xf32>, vector<104x3xf32> -> vector<104x3xf32>
    %c0_15 = arith.constant 0 : index
    %c0_16 = arith.constant 0 : index
    %17 = vector.load %arg7[%c0_15, %c0_16] : memref<1x3xf32, #tpu.memory_space<vmem>>, vector<1x3xf32>
    %18 = vector.broadcast %17 : vector<1x3xf32> to vector<104x3xf32>
    %19 = arith.addf %16, %18 : vector<104x3xf32>
    %c0_17 = arith.constant 0 : index
    %c0_18 = arith.constant 0 : index
    %20 = vector.load %arg8[%c0_17, %c0_18] : memref<104x3xf32, #tpu.memory_space<vmem>>, vector<104x3xf32>
    tpu.vector_store %arg8[%c0_17, %c0_18], %19 {strides = array<i32>} : memref<104x3xf32, #tpu.memory_space<vmem>>, vector<104x3xf32>,
    return
  }
  func.func @transform_0(%arg0: i32) -> (i32, i32) {
    %c0_i32 = arith.constant 0 : i32
    %c0_i32_0 = arith.constant 0 : i32
    return %arg0, %c0_i32 : i32, i32
  }
  func.func @transform_1(%arg0: i32) -> (i32, i32) {
    %c0_i32 = arith.constant 0 : i32
    %c0_i32_0 = arith.constant 0 : i32
    %c0_i32_1 = arith.constant 0 : i32
    return %c0_i32, %c0_i32_0 : i32, i32
  }
  func.func @transform_2(%arg0: i32) -> (i32, i32) {
    %c0_i32 = arith.constant 0 : i32
    %c0_i32_0 = arith.constant 0 : i32
    %c0_i32_1 = arith.constant 0 : i32
    return %c0_i32, %c0_i32_0 : i32, i32
  }
  func.func @transform_3(%arg0: i32) -> (i32, i32) {
    %c0_i32 = arith.constant 0 : i32
    %c0_i32_0 = arith.constant 0 : i32
    %c0_i32_1 = arith.constant 0 : i32
    return %c0_i32, %c0_i32_0 : i32, i32
  }
  func.func @transform_4(%arg0: i32) -> (i32, i32) {
    %c0_i32 = arith.constant 0 : i32
    %c0_i32_0 = arith.constant 0 : i32
    %c0_i32_1 = arith.constant 0 : i32
    return %c0_i32, %c0_i32_0 : i32, i32
  }
  func.func @transform_5(%arg0: i32) -> (i32, i32) {
    %c0_i32 = arith.constant 0 : i32
    %c0_i32_0 = arith.constant 0 : i32
    %c0_i32_1 = arith.constant 0 : i32
    return %c0_i32, %c0_i32_0 : i32, i32
  }
  func.func @transform_6(%arg0: i32) -> (i32, i32) {
    %c0_i32 = arith.constant 0 : i32
    %c0_i32_0 = arith.constant 0 : i32
    %c0_i32_1 = arith.constant 0 : i32
    return %c0_i32, %c0_i32_0 : i32, i32
  }
  func.func @transform_7(%arg0: i32) -> (i32, i32) {
    %c0_i32 = arith.constant 0 : i32
    %c0_i32_0 = arith.constant 0 : i32
    return %arg0, %c0_i32 : i32, i32
  }
}

</mosaic_0001>

<llo_original>
// kernel: tpu_custom_call.1
$region0: #{tpu_custom_call.1}
  #allocation0 [shape = 'u32[]', space=smem, size = 0x4, offset = 0x4, fixed_abs, tag = 'smem constant byte address 0x4 - core index']
  #allocation1 [shape = 'u32[144,128]{1,0:T(1,128)}', space=vmem, size = 0x12000, scoped, tag = 'internal scratch']
  %s0 = inlined_call_operand.vmem [shape: f32[200,150], index: 0, kind: input, shape index: {}]
  %s1 = inlined_call_operand.vmem [shape: f32[150,64], index: 1, kind: input, shape index: {}]
  %s2 = inlined_call_operand.vmem [shape: f32[1,64], index: 2, kind: input, shape index: {}]
  %s3 = inlined_call_operand.vmem [shape: f32[64,64], index: 3, kind: input, shape index: {}]
  %s4 = inlined_call_operand.vmem [shape: f32[1,64], index: 4, kind: input, shape index: {}]
  %s5 = inlined_call_operand.vmem [shape: f32[64,3], index: 5, kind: input, shape index: {}]
  %s6 = inlined_call_operand.vmem [shape: f32[1,3], index: 6, kind: input, shape index: {}]
  %s7 = inlined_call_operand.vmem [shape: f32[200,3], index: 7, kind: output, shape index: {}]
  %s8 = sld [smem:[#allocation0]]
  $region109: #{tpu_custom_call.1} parent=0
    _
  %s10 = ssub.s32 1, %s8
  %s11 = scalar_select 0, %s10, %s8
  $region1: #{tpu_custom_call.1} parent=0
    #allocation2 [shape = 'u8[106496]{0}', space=vmem, size = 0x1a000, scoped, tag = 'output window, operand 0']
    loop: start=0, step=1, limit=4
    $region2: #{tpu_custom_call.1} parent=1 // loop_pre_header
      _
    $region3: #{tpu_custom_call.1} parent=1 // loop_header
      %s13 = sphi 0, %s17
      %p14 = scmp.ge.s32.totalorder %s13, 4
      %s23 = sphi 0, %s25
      %s26 = sphi 0, %s23
      %s27 = sphi 0, %s26
      %s43 = sphi 0, %s27
      %s47 = sphi 0, %s47
      %s49 = sphi 0, %s47
      %s50 = sphi 0, %s49
      %s64 = sphi 0, %s50
      %s68 = sphi 0, %s68
      %s70 = sphi 0, %s68
      %s71 = sphi 0, %s70
      %s85 = sphi 0, %s71
      %s89 = sphi 0, %s89
      %s91 = sphi 0, %s89
      %s92 = sphi 0, %s91
      %s106 = sphi 0, %s92
      %s110 = sphi 0, %s110
      %s112 = sphi 0, %s110
      %s113 = sphi 0, %s112
      %s127 = sphi 0, %s113
      %s131 = sphi 0, %s131
      %s133 = sphi 0, %s131
      %s134 = sphi 0, %s133
      %s148 = sphi 0, %s134
      %s152 = sphi 0, %s152
      %s154 = sphi 0, %s152
      %s155 = sphi 0, %s154
      %s169 = sphi 0, %s155
      %s175 = sphi 0, %s177
      %s178 = sphi 0, %s175
      %s179 = sphi 0, %s178
      %s195 = sphi 0, %s179
    $region4: #{tpu_custom_call.1} parent=1 // loop_header_branch
      %16 = sbr.rel (%p14) target = $region8
    $region5: #{tpu_custom_call.1} parent=1 // loop_body
      %s18 = ssub.s32 %s13, 1
      %s19 = ssub.s32 %s13, 2
      %s20 = sadd.s32 %s13, 1
      %s21 = ssub.s32 %s13, %s20
      %p22 = scmp.eq.s32.totalorder %s21, 0
      %s24 = sadd.s32 %s23, 1
      %s25 = scalar_select %p22, %s23, %s24
      %p28 = pneg %p22
      %p29 = scmp.eq.s32.totalorder %s13, 1
      %p30 = por %p28, %p29
      %p31 = scmp.ne.s32.totalorder %s23, %s26
      %p32 = scmp.eq.s32.totalorder %s13, 0
      %p33 = por %p31, %p32
      %p34 = scmp.ne.s32.totalorder %s23, %s26
      %p35 = scmp.eq.s32.totalorder %s18, 1
      %p36 = por %p34, %p35
      %p37 = scmp.ne.s32.totalorder %s26, %s27
      %p38 = scmp.eq.s32.totalorder %s18, 0
      %p39 = por %p37, %p38
      %p40 = scmp.ne.s32.totalorder %s26, %s27
      %p41 = scmp.eq.s32.totalorder %s19, 1
      %p42 = por %p40, %p41
      %p44 = scmp.ne.s32.totalorder %s27, %s43
      %p45 = scmp.eq.s32.totalorder %s19, 0
      %p46 = por %p44, %p45
      %s48 = sadd.s32 %s47, 1
      %p51 = scmp.eq.s32.totalorder %s13, 1
      %p52 = scmp.ne.s32.totalorder %s47, %s49
      %p53 = scmp.eq.s32.totalorder %s13, 0
      %p54 = por %p52, %p53
      %p55 = scmp.ne.s32.totalorder %s47, %s49
      %p56 = scmp.eq.s32.totalorder %s18, 1
      %p57 = por %p55, %p56
      %p58 = scmp.ne.s32.totalorder %s49, %s50
      %p59 = scmp.eq.s32.totalorder %s18, 0
      %p60 = por %p58, %p59
      %p61 = scmp.ne.s32.totalorder %s49, %s50
      %p62 = scmp.eq.s32.totalorder %s19, 1
      %p63 = por %p61, %p62
      %p65 = scmp.ne.s32.totalorder %s50, %s64
      %p66 = scmp.eq.s32.totalorder %s19, 0
      %p67 = por %p65, %p66
      %s69 = sadd.s32 %s68, 1
      %p72 = scmp.eq.s32.totalorder %s13, 1
      %p73 = scmp.ne.s32.totalorder %s68, %s70
      %p74 = scmp.eq.s32.totalorder %s13, 0
      %p75 = por %p73, %p74
      %p76 = scmp.ne.s32.totalorder %s68, %s70
      %p77 = scmp.eq.s32.totalorder %s18, 1
      %p78 = por %p76, %p77
      %p79 = scmp.ne.s32.totalorder %s70, %s71
      %p80 = scmp.eq.s32.totalorder %s18, 0
      %p81 = por %p79, %p80
      %p82 = scmp.ne.s32.totalorder %s70, %s71
      %p83 = scmp.eq.s32.totalorder %s19, 1
      %p84 = por %p82, %p83
      %p86 = scmp.ne.s32.totalorder %s71, %s85
      %p87 = scmp.eq.s32.totalorder %s19, 0
      %p88 = por %p86, %p87
      %s90 = sadd.s32 %s89, 1
      %p93 = scmp.eq.s32.totalorder %s13, 1
      %p94 = scmp.ne.s32.totalorder %s89, %s91
      %p95 = scmp.eq.s32.totalorder %s13, 0
      %p96 = por %p94, %p95
      %p97 = scmp.ne.s32.totalorder %s89, %s91
      %p98 = scmp.eq.s32.totalorder %s18, 1
      %p99 = por %p97, %p98
      %p100 = scmp.ne.s32.totalorder %s91, %s92
      %p101 = scmp.eq.s32.totalorder %s18, 0
      %p102 = por %p100, %p101
      %p103 = scmp.ne.s32.totalorder %s91, %s92
      %p104 = scmp.eq.s32.totalorder %s19, 1
      %p105 = por %p103, %p104
      %p107 = scmp.ne.s32.totalorder %s92, %s106
      %p108 = scmp.eq.s32.totalorder %s19, 0
      %p109 = por %p107, %p108
      %s111 = sadd.s32 %s110, 1
      %p114 = scmp.eq.s32.totalorder %s13, 1
      %p115 = scmp.ne.s32.totalorder %s110, %s112
      %p116 = scmp.eq.s32.totalorder %s13, 0
      %p117 = por %p115, %p116
      %p118 = scmp.ne.s32.totalorder %s110, %s112
      %p119 = scmp.eq.s32.totalorder %s18, 1
      %p120 = por %p118, %p119
      %p121 = scmp.ne.s32.totalorder %s112, %s113
      %p122 = scmp.eq.s32.totalorder %s18, 0
      %p123 = por %p121, %p122
      %p124 = scmp.ne.s32.totalorder %s112, %s113
      %p125 = scmp.eq.s32.totalorder %s19, 1
      %p126 = por %p124, %p125
      %p128 = scmp.ne.s32.totalorder %s113, %s127
      %p129 = scmp.eq.s32.totalorder %s19, 0
      %p130 = por %p128, %p129
      %s132 = sadd.s32 %s131, 1
      %p135 = scmp.eq.s32.totalorder %s13, 1
      %p136 = scmp.ne.s32.totalorder %s131, %s133
      %p137 = scmp.eq.s32.totalorder %s13, 0
      %p138 = por %p136, %p137
      %p139 = scmp.ne.s32.totalorder %s131, %s133
      %p140 = scmp.eq.s32.totalorder %s18, 1
      %p141 = por %p139, %p140
      %p142 = scmp.ne.s32.totalorder %s133, %s134
      %p143 = scmp.eq.s32.totalorder %s18, 0
      %p144 = por %p142, %p143
      %p145 = scmp.ne.s32.totalorder %s133, %s134
      %p146 = scmp.eq.s32.totalorder %s19, 1
      %p147 = por %p145, %p146
      %p149 = scmp.ne.s32.totalorder %s134, %s148
      %p150 = scmp.eq.s32.totalorder %s19, 0
      %p151 = por %p149, %p150
      %s153 = sadd.s32 %s152, 1
      %p156 = scmp.eq.s32.totalorder %s13, 1
      %p157 = scmp.ne.s32.totalorder %s152, %s154
      %p158 = scmp.eq.s32.totalorder %s13, 0
      %p159 = por %p157, %p158
      %p160 = scmp.ne.s32.totalorder %s152, %s154
      %p161 = scmp.eq.s32.totalorder %s18, 1
      %p162 = por %p160, %p161
      %p163 = scmp.ne.s32.totalorder %s154, %s155
      %p164 = scmp.eq.s32.totalorder %s18, 0
      %p165 = por %p163, %p164
      %p166 = scmp.ne.s32.totalorder %s154, %s155
      %p167 = scmp.eq.s32.totalorder %s19, 1
      %p168 = por %p166, %p167
      %p170 = scmp.ne.s32.totalorder %s155, %s169
      %p171 = scmp.eq.s32.totalorder %s19, 0
      %p172 = por %p170, %p171
      %s173 = ssub.s32 %s13, %s20
      %p174 = scmp.eq.s32.totalorder %s173, 0
      %s176 = sadd.s32 %s175, 1
      %s177 = scalar_select %p174, %s175, %s176
      %p180 = pneg %p174
      %p181 = scmp.eq.s32.totalorder %s13, 1
      %p182 = por %p180, %p181
      %p183 = scmp.ne.s32.totalorder %s175, %s178
      %p184 = scmp.eq.s32.totalorder %s13, 0
      %p185 = por %p183, %p184
      %p186 = scmp.ne.s32.totalorder %s175, %s178
      %p187 = scmp.eq.s32.totalorder %s18, 1
      %p188 = por %p186, %p187
      %p189 = scmp.ne.s32.totalorder %s178, %s179
      %p190 = scmp.eq.s32.totalorder %s18, 0
      %p191 = por %p189, %p190
      %p192 = scmp.ne.s32.totalorder %s178, %s179
      %p193 = scmp.eq.s32.totalorder %s19, 1
      %p194 = por %p192, %p193
      %p196 = scmp.ne.s32.totalorder %s179, %s195
      %p197 = scmp.eq.s32.totalorder %s19, 0
      %p198 = por %p196, %p197
      %p199 = scmp.le.s32.totalorder 1, %s13
      %p200 = scmp.lt.s32.totalorder %s13, 3
      %p201 = pnand %p199, %p200
      %p202 = pneg %p201
      // Predicated region
      $region9: #{tpu_custom_call.1} parent=5 // pred_check
        _
      $region10: #{tpu_custom_call.1} parent=5 // pred_check_branch
        %204 = sbr.rel (%p201) target = $region12
      $region11: #{tpu_custom_call.1} parent=5 // pred_region
        %s205 = ssub.s32 %s13, 1
        // Predicated region
        $region13: #{tpu_custom_call.1} parent=11 // pred_check
          %p206 = pneg %p60
        $region14: #{tpu_custom_call.1} parent=11 // pred_check_branch
          %208 = sbr.rel (%p206) target = $region16
        $region15: #{tpu_custom_call.1} parent=11 // pred_region
          _
        $region16: #{tpu_custom_call.1} parent=11 // pred_fallthru
          _
        // Predicated region
        $region17: #{tpu_custom_call.1} parent=11 // pred_check
          %p209 = pneg %p81
        $region18: #{tpu_custom_call.1} parent=11 // pred_check_branch
          %211 = sbr.rel (%p209) target = $region20
        $region19: #{tpu_custom_call.1} parent=11 // pred_region
          _
        $region20: #{tpu_custom_call.1} parent=11 // pred_fallthru
          _
        // Predicated region
        $region21: #{tpu_custom_call.1} parent=11 // pred_check
          %p212 = pneg %p102
        $region22: #{tpu_custom_call.1} parent=11 // pred_check_branch
          %214 = sbr.rel (%p212) target = $region24
        $region23: #{tpu_custom_call.1} parent=11 // pred_region
          _
        $region24: #{tpu_custom_call.1} parent=11 // pred_fallthru
          _
        // Predicated region
        $region25: #{tpu_custom_call.1} parent=11 // pred_check
          %p215 = pneg %p123
        $region26: #{tpu_custom_call.1} parent=11 // pred_check_branch
          %217 = sbr.rel (%p215) target = $region28
        $region27: #{tpu_custom_call.1} parent=11 // pred_region
          _
        $region28: #{tpu_custom_call.1} parent=11 // pred_fallthru
          _
        // Predicated region
        $region29: #{tpu_custom_call.1} parent=11 // pred_check
          %p218 = pneg %p144
        $region30: #{tpu_custom_call.1} parent=11 // pred_check_branch
          %220 = sbr.rel (%p218) target = $region32
        $region31: #{tpu_custom_call.1} parent=11 // pred_region
          _
        $region32: #{tpu_custom_call.1} parent=11 // pred_fallthru
          _
        // Predicated region
        $region33: #{tpu_custom_call.1} parent=11 // pred_check
          %p221 = pneg %p165
        $region34: #{tpu_custom_call.1} parent=11 // pred_check_branch
          %223 = sbr.rel (%p221) target = $region36
        $region35: #{tpu_custom_call.1} parent=11 // pred_region
          _
        $region36: #{tpu_custom_call.1} parent=11 // pred_fallthru
          _
      $region12: #{tpu_custom_call.1} parent=5 // pred_fallthru
        _
      %p224 = scmp.lt.s32.totalorder %s13, 2
      // Predicated region
      $region37: #{tpu_custom_call.1} parent=5 // pred_check
        %p225 = pneg %p224
      $region38: #{tpu_custom_call.1} parent=5 // pred_check_branch
        %227 = sbr.rel (%p225) target = $region40
      $region39: #{tpu_custom_call.1} parent=5 // pred_region
        // Predicated region
        $region41: #{tpu_custom_call.1} parent=39 // pred_check
          %p228 = pneg %p33
        $region42: #{tpu_custom_call.1} parent=39 // pred_check_branch
          %230 = sbr.rel (%p228) target = $region44
        $region43: #{tpu_custom_call.1} parent=39 // pred_region
          %s231 = smul.u32 13, %s13
          %s232 = ssub.s32 25, %s231
          %p233 = scmp.lt.s32.totalorder %s232, 13
          %s234 = scalar_select %p233, %s232, 13
          %s235 = smul.u32 128, %s234
          %s236 = smul.u32 %s235, 2
          %p237 = scmp.lt.s32.totalorder %s231, 24
          %s238 = scalar_select %p237, %s231, 24
          %s239 = smul.addr %s238, 2
          %s240 = smul.addr %s239, 8
          %s241 = scalar_lea.vmem %s0, %s240
          %s242 = smul.u32 13, %s13
          %s243 = ssub.s32 25, %s242
          %p244 = scmp.lt.s32.totalorder %s243, 13
          %s245 = scalar_select %p244, %s243, 13
          %s246 = smul.u32 128, %s245
          %s247 = smul.u32 %s246, 2
        $region44: #{tpu_custom_call.1} parent=39 // pred_fallthru
          _
      $region40: #{tpu_custom_call.1} parent=5 // pred_fallthru
        _
      %p248 = scmp.le.s32.totalorder 1, %s13
      %p249 = scmp.lt.s32.totalorder %s13, 3
      %p250 = pnand %p248, %p249
      %p251 = pneg %p250
      // Predicated region
      $region45: #{tpu_custom_call.1} parent=5 // pred_check
        _
      $region46: #{tpu_custom_call.1} parent=5 // pred_check_branch
        %253 = sbr.rel (%p250) target = $region48
      $region47: #{tpu_custom_call.1} parent=5 // pred_region
        %s254 = ssub.s32 %s13, 1
        %s255 = smul.u32 13, %s18
        %s256 = ssub.s32 25, %s255
        %p257 = scmp.lt.s32.totalorder %s256, 13
        %s258 = scalar_select %p257, %s256, 13
        %s259 = smul.u32 128, %s258
        %s260 = smul.u32 %s259, 2
        %p261 = scmp.lt.s32.totalorder %s255, 24
        %s262 = scalar_select %p261, %s255, 24
        %s263 = smul.addr %s262, 2
        %s264 = smul.addr %s263, 8
        %s265 = scalar_lea.vmem %s0, %s264
        %p266 = pneg %p39
        %p267 = pneg %p36
        %p268 = pneg %p60
        %p269 = pneg %p57
        %p270 = pneg %p81
        %p271 = pneg %p78
        %p272 = pneg %p102
        %p273 = pneg %p99
        %p274 = pneg %p123
        %p275 = pneg %p120
        %p276 = pneg %p144
        %p277 = pneg %p141
        %p278 = pneg %p165
        %p279 = pneg %p162
        %p280 = pneg %p191
        %p281 = pneg %p188
        %s282 = sand.u32 %s178, 1
        %s283 = sand.u32 %s178, 1
        %s284 = smul.addr %s283, 104
        %s285 = scalar_lea.vmem [#allocation2], %s284
        %s286 = smul.u32 13, %s18
        %s287 = ssub.s32 25, %s286
        %p288 = scmp.lt.s32.totalorder %s287, 13
        %s289 = scalar_select %p288, %s287, 13
        %s290 = smul.u32 128, %s289
        %s291 = smul.u32 %s290, 2
        %p292 = scmp.lt.s32.totalorder %s286, 24
        %s293 = scalar_select %p292, %s286, 24
        %s294 = smul.addr %s293, 2
        %s295 = smul.addr %s294, 8
        %s296 = scalar_lea.vmem %s0, %s295
        %s297 = smul.u32 13, %s18
        %s298 = ssub.s32 25, %s297
        %p299 = scmp.lt.s32.totalorder %s298, 13
        %s300 = scalar_select %p299, %s298, 13
        %s301 = smul.u32 128, %s300
        %s302 = smul.u32 %s301, 2
        %s303 = smul.u32 13, %s18
        %s304 = ssub.s32 25, %s303
        %p305 = scmp.lt.s32.totalorder %s304, 13
        %s306 = scalar_select %p305, %s304, 13
        %s307 = smul.u32 128, %s306
        %v308 = vld [vmem:[%s296] sm:$0xff]
        %v309 = vld [vmem:[%s296 + $0x8] sm:$0xff]
        %v310 = vld [vmem:[%s296 + $0x10] sm:$0xff]
        %v311 = vld [vmem:[%s296 + $0x18] sm:$0xff]
        %v312 = vld [vmem:[%s296 + $0x20] sm:$0xff]
        %v313 = vld [vmem:[%s296 + $0x28] sm:$0xff]
        %v314 = vld [vmem:[%s296 + $0x30] sm:$0xff]
        %v315 = vld [vmem:[%s296 + $0x38] sm:$0xff]
        %v316 = vld [vmem:[%s296 + $0x40] sm:$0xff]
        %v317 = vld [vmem:[%s296 + $0x48] sm:$0xff]
        %v318 = vld [vmem:[%s296 + $0x50] sm:$0xff]
        %v319 = vld [vmem:[%s296 + $0x58] sm:$0xff]
        %v320 = vld [vmem:[%s296 + $0x60] sm:$0xff]
        %v321 = vld [vmem:[%s296 + $0x68] sm:$0xff]
        %v322 = vld [vmem:[%s296 + $0x70] sm:$0xff]
        %v323 = vld [vmem:[%s296 + $0x78] sm:$0xff]
        %v324 = vld [vmem:[%s296 + $0x80] sm:$0xff]
        %v325 = vld [vmem:[%s296 + $0x88] sm:$0xff]
        %v326 = vld [vmem:[%s296 + $0x90] sm:$0xff]
        %v327 = vld [vmem:[%s296 + $0x98] sm:$0xff]
        %v328 = vld [vmem:[%s296 + $0xa0] sm:$0xff]
        %v329 = vld [vmem:[%s296 + $0xa8] sm:$0xff]
        %v330 = vld [vmem:[%s296 + $0xb0] sm:$0xff]
        %v331 = vld [vmem:[%s296 + $0xb8] sm:$0xff]
        %v332 = vld [vmem:[%s296 + $0xc0] sm:$0xff]
        %v333 = vld [vmem:[%s296 + $0xc8] sm:$0xff]
        %v334 = vld [vmem:[%s1] sm:$0xff]
        %v335 = vld [vmem:[%s1 + $0x8] sm:$0xff]
        %v336 = vld [vmem:[%s1 + $0x10] sm:$0xff]
        %v337 = vld [vmem:[%s1 + $0x18] sm:$0xff]
        %v338 = vld [vmem:[%s1 + $0x20] sm:$0xff]
        %v339 = vld [vmem:[%s1 + $0x28] sm:$0xff]
        %v340 = vld [vmem:[%s1 + $0x30] sm:$0xff]
        %v341 = vld [vmem:[%s1 + $0x38] sm:$0xff]
        %v342 = vld [vmem:[%s1 + $0x40] sm:$0xff]
        %v343 = vld [vmem:[%s1 + $0x48] sm:$0xff]
        %v344 = vld [vmem:[%s1 + $0x50] sm:$0xff]
        %v345 = vld [vmem:[%s1 + $0x58] sm:$0xff]
        %v346 = vld [vmem:[%s1 + $0x60] sm:$0xff]
        %v347 = vld [vmem:[%s1 + $0x68] sm:$0xff]
        %v348 = vld [vmem:[%s1 + $0x70] sm:$0xff]
        %v349 = vld [vmem:[%s1 + $0x78] sm:$0xff]
        %v350 = vld [vmem:[%s1 + $0x80] sm:$0xff]
        %v351 = vld [vmem:[%s1 + $0x88] sm:$0xff]
        %v352 = vld [vmem:[%s1 + $0x90] sm:$0x3f]
        %v353 = vld [vmem:[%s2] sm:$0x1]
        %v355 = vlaneseq
        %v356 = vshrl.u32 %v355, 7
        %v357 = vsub.s32 0, %v356
        %v358 = vrot.slane %v353, %v357
        %vm360 = vcmask 179200
        %v362 = vsel %vm360, %v309, 0
        %v365 = vsel %vm360, %v311, 0
        %v368 = vsel %vm360, %v313, 0
        %v371 = vsel %vm360, %v315, 0
        %v374 = vsel %vm360, %v317, 0
        %v377 = vsel %vm360, %v319, 0
        %v380 = vsel %vm360, %v321, 0
        %v383 = vsel %vm360, %v323, 0
        %v386 = vsel %vm360, %v325, 0
        %v389 = vsel %vm360, %v327, 0
        %v392 = vsel %vm360, %v329, 0
        %v395 = vsel %vm360, %v331, 0
        %v398 = vsel %vm360, %v333, 0
        %vm400 = vcmask 1045504
        %v402 = vsel %vm400, %v352, 0
        %404 = vmatprep.subr.mxu0 0.0
        %405 = vmatpush1.msra.mxu0 %v349
        %406 = vmatprep.subr.mxu0 0.0
        %407 = vmatpush1.msra.mxu0 %v348
        %408 = vmatprep.subr.mxu0 0.0
        %409 = vmatpush1.msra.mxu0 %v347
        %410 = vmatprep.subr.mxu0 0.0
        %411 = vmatpush1.msra.mxu0 %v346
        %412 = vmatprep.subr.mxu0 0.0
        %413 = vmatpush1.msra.mxu0 %v345
        %414 = vmatprep.subr.mxu0 0.0
        %415 = vmatpush1.msra.mxu0 %v344
        %416 = vmatprep.subr.mxu0 0.0
        %417 = vmatpush1.msra.mxu0 %v343
        %418 = vmatprep.subr.mxu0 0.0
        %419 = vmatpush1.msra.mxu0 %v342
        %420 = vmatprep.subr.mxu0 0.0
        %421 = vmatpush1.msra.mxu0 %v341
        %422 = vmatprep.subr.mxu0 0.0
        %423 = vmatpush1.msra.mxu0 %v340
        %424 = vmatprep.subr.mxu0 0.0
        %425 = vmatpush1.msra.mxu0 %v339
        %426 = vmatprep.subr.mxu0 0.0
        %427 = vmatpush1.msra.mxu0 %v338
        %428 = vmatprep.subr.mxu0 0.0
        %429 = vmatpush1.msra.mxu0 %v337
        %430 = vmatprep.subr.mxu0 0.0
        %431 = vmatpush1.msra.mxu0 %v336
        %432 = vmatprep.subr.mxu0 0.0
        %433 = vmatpush1.msra.mxu0 %v335
        %434 = vmatprep.subr.mxu0 0.0
        %435 = vmatpush1.msra.mxu0 %v334
        %436 = vmatprep.subr.mxu0 0.0
        %437 = vmatpush2.msra.mxu0 0.0
        %438 = vmatprep.subr.mxu0 0.0
        %439 = vmatpush2.msra.mxu0 0.0
        %440 = vmatprep.subr.mxu0 0.0
        %441 = vmatpush2.msra.mxu0 0.0
        %442 = vmatprep.subr.mxu0 0.0
        %443 = vmatpush2.msra.mxu0 0.0
        %444 = vmatprep.subr.mxu0 0.0
        %445 = vmatpush2.msra.mxu0 0.0
        %446 = vmatprep.subr.mxu0 0.0
        %447 = vmatpush2.msra.mxu0 0.0
        %448 = vmatprep.subr.mxu0 0.0
        %449 = vmatpush2.msra.mxu0 0.0
        %450 = vmatprep.subr.mxu0 0.0
        %451 = vmatpush2.msra.mxu0 0.0
        %452 = vmatprep.subr.mxu0 0.0
        %453 = vmatpush2.msra.mxu0 0.0
        %454 = vmatprep.subr.mxu0 0.0
        %455 = vmatpush2.msra.mxu0 0.0
        %456 = vmatprep.subr.mxu0 0.0
        %457 = vmatpush2.msra.mxu0 0.0
        %458 = vmatprep.subr.mxu0 0.0
        %459 = vmatpush2.msra.mxu0 0.0
        %460 = vmatprep.subr.mxu0 0.0
        %461 = vmatpush2.msra.mxu0 0.0
        %462 = vmatprep.subr.mxu0 0.0
        %463 = vmatpush2.msra.mxu0 %v402
        %464 = vmatprep.subr.mxu0 0.0
        %465 = vmatpush2.msra.mxu0 %v351
        %466 = vmatprep.subr.mxu0 0.0
        %467 = vmatpush2.msra.mxu0 %v350
        %468 = vmatprep.mubr.f32.mxu0 %v362
        %469 = vmatmul.mubr.f32.gmra.mxu0 %v308
        %v470 = vpop.f32.mrf.mxu0
        %v471 = vadd.f32 %v358, %v470
        %v472 = vpop.f32.mrf.mxu0
        %473 = vmatprep.mubr.f32.mxu0 %v365
        %474 = vmatmul.mubr.f32.gmra.mxu0 %v310
        %v475 = vpop.f32.mrf.mxu0
        %v476 = vadd.f32 %v358, %v475
        %v477 = vpop.f32.mrf.mxu0
        %478 = vmatprep.mubr.f32.mxu0 %v368
        %479 = vmatmul.mubr.f32.gmra.mxu0 %v312
        %v480 = vpop.f32.mrf.mxu0
        %v481 = vadd.f32 %v358, %v480
        %v482 = vpop.f32.mrf.mxu0
        %483 = vmatprep.mubr.f32.mxu0 %v371
        %484 = vmatmul.mubr.f32.gmra.mxu0 %v314
        %v485 = vpop.f32.mrf.mxu0
        %v486 = vadd.f32 %v358, %v485
        %v487 = vpop.f32.mrf.mxu0
        %488 = vmatprep.mubr.f32.mxu0 %v374
        %489 = vmatmul.mubr.f32.gmra.mxu0 %v316
        %v490 = vpop.f32.mrf.mxu0
        %v491 = vadd.f32 %v358, %v490
        %v492 = vpop.f32.mrf.mxu0
        %493 = vmatprep.mubr.f32.mxu0 %v377
        %494 = vmatmul.mubr.f32.gmra.mxu0 %v318
        %v495 = vpop.f32.mrf.mxu0
        %v496 = vadd.f32 %v358, %v495
        %v497 = vpop.f32.mrf.mxu0
        %498 = vmatprep.mubr.f32.mxu0 %v380
        %499 = vmatmul.mubr.f32.gmra.mxu0 %v320
        %v500 = vpop.f32.mrf.mxu0
        %v501 = vadd.f32 %v358, %v500
        %v502 = vpop.f32.mrf.mxu0
        %503 = vmatprep.mubr.f32.mxu0 %v383
        %504 = vmatmul.mubr.f32.gmra.mxu0 %v322
        %v505 = vpop.f32.mrf.mxu0
        %v506 = vadd.f32 %v358, %v505
        %v507 = vpop.f32.mrf.mxu0
        %508 = vmatprep.mubr.f32.mxu0 %v386
        %509 = vmatmul.mubr.f32.gmra.mxu0 %v324
        %v510 = vpop.f32.mrf.mxu0
        %v511 = vadd.f32 %v358, %v510
        %v512 = vpop.f32.mrf.mxu0
        %513 = vmatprep.mubr.f32.mxu0 %v389
        %514 = vmatmul.mubr.f32.gmra.mxu0 %v326
        %v515 = vpop.f32.mrf.mxu0
        %v516 = vadd.f32 %v358, %v515
        %v517 = vpop.f32.mrf.mxu0
        %518 = vmatprep.mubr.f32.mxu0 %v392
        %519 = vmatmul.mubr.f32.gmra.mxu0 %v328
        %v520 = vpop.f32.mrf.mxu0
        %v521 = vadd.f32 %v358, %v520
        %v522 = vpop.f32.mrf.mxu0
        %523 = vmatprep.mubr.f32.mxu0 %v395
        %524 = vmatmul.mubr.f32.gmra.mxu0 %v330
        %v525 = vpop.f32.mrf.mxu0
        %v526 = vadd.f32 %v358, %v525
        %v527 = vpop.f32.mrf.mxu0
        %528 = vmatprep.mubr.f32.mxu0 %v398
        %529 = vmatmul.mubr.f32.gmra.mxu0 %v332
        %v530 = vpop.f32.mrf.mxu0
        %v531 = vadd.f32 %v358, %v530
        %v532 = vpop.f32.mrf.mxu0
        %533 = vdwg.mxu0
        %v534 = vmax.f32 %v471, 0.0
        %v535 = vmax.f32 %v476, 0.0
        %v536 = vmax.f32 %v481, 0.0
        %v537 = vmax.f32 %v486, 0.0
        %v538 = vmax.f32 %v491, 0.0
        %v539 = vmax.f32 %v496, 0.0
        %v540 = vmax.f32 %v501, 0.0
        %v541 = vmax.f32 %v506, 0.0
        %v542 = vmax.f32 %v511, 0.0
        %v543 = vmax.f32 %v516, 0.0
        %v544 = vmax.f32 %v521, 0.0
        %v545 = vmax.f32 %v526, 0.0
        %v546 = vmax.f32 %v531, 0.0
        %v547 = vld [vmem:[%s3] sm:$0xff]
        %v548 = vld [vmem:[%s3 + $0x8] sm:$0xff]
        %v549 = vld [vmem:[%s3 + $0x10] sm:$0xff]
        %v550 = vld [vmem:[%s3 + $0x18] sm:$0xff]
        %v551 = vld [vmem:[%s3 + $0x20] sm:$0xff]
        %v552 = vld [vmem:[%s3 + $0x28] sm:$0xff]
        %v553 = vld [vmem:[%s3 + $0x30] sm:$0xff]
        %v554 = vld [vmem:[%s3 + $0x38] sm:$0xff]
        %v555 = vld [vmem:[%s4] sm:$0x1]
        %v557 = vlaneseq
        %v558 = vshrl.u32 %v557, 7
        %v559 = vsub.s32 0, %v558
        %v560 = vrot.slane %v555, %v559
        %vm562 = vcmask 523264
        %v564 = vsel %vm562, %v534, 0
        %v567 = vsel %vm562, %v535, 0
        %v570 = vsel %vm562, %v536, 0
        %v573 = vsel %vm562, %v537, 0
        %v576 = vsel %vm562, %v538, 0
        %v579 = vsel %vm562, %v539, 0
        %v582 = vsel %vm562, %v540, 0
        %v585 = vsel %vm562, %v541, 0
        %v588 = vsel %vm562, %v542, 0
        %v591 = vsel %vm562, %v543, 0
        %v594 = vsel %vm562, %v544, 0
        %v597 = vsel %vm562, %v545, 0
        %v600 = vsel %vm562, %v546, 0
        %602 = vmatprep.subr.mxu0 0.0
        %603 = vmatpush1.msra.mxu0 0.0
        %604 = vmatprep.subr.mxu0 0.0
        %605 = vmatpush1.msra.mxu0 0.0
        %606 = vmatprep.subr.mxu0 0.0
        %607 = vmatpush1.msra.mxu0 0.0
        %608 = vmatprep.subr.mxu0 0.0
        %609 = vmatpush1.msra.mxu0 0.0
        %610 = vmatprep.subr.mxu0 0.0
        %611 = vmatpush1.msra.mxu0 0.0
        %612 = vmatprep.subr.mxu0 0.0
        %613 = vmatpush1.msra.mxu0 0.0
        %614 = vmatprep.subr.mxu0 0.0
        %615 = vmatpush1.msra.mxu0 0.0
        %616 = vmatprep.subr.mxu0 0.0
        %617 = vmatpush1.msra.mxu0 0.0
        %618 = vmatprep.subr.mxu0 0.0
        %619 = vmatpush1.msra.mxu0 %v554
        %620 = vmatprep.subr.mxu0 0.0
        %621 = vmatpush1.msra.mxu0 %v553
        %622 = vmatprep.subr.mxu0 0.0
        %623 = vmatpush1.msra.mxu0 %v552
        %624 = vmatprep.subr.mxu0 0.0
        %625 = vmatpush1.msra.mxu0 %v551
        %626 = vmatprep.subr.mxu0 0.0
        %627 = vmatpush1.msra.mxu0 %v550
        %628 = vmatprep.subr.mxu0 0.0
        %629 = vmatpush1.msra.mxu0 %v549
        %630 = vmatprep.subr.mxu0 0.0
        %631 = vmatpush1.msra.mxu0 %v548
        %632 = vmatprep.subr.mxu0 0.0
        %633 = vmatpush1.msra.mxu0 %v547
        %634 = vmatprep.subr.mxu0 0.0
        %635 = vmatpush2.msra.mxu0 0.0
        %636 = vmatprep.subr.mxu0 0.0
        %637 = vmatpush2.msra.mxu0 0.0
        %638 = vmatprep.subr.mxu0 0.0
        %639 = vmatpush2.msra.mxu0 0.0
        %640 = vmatprep.subr.mxu0 0.0
        %641 = vmatpush2.msra.mxu0 0.0
        %642 = vmatprep.subr.mxu0 0.0
        %643 = vmatpush2.msra.mxu0 0.0
        %644 = vmatprep.subr.mxu0 0.0
        %645 = vmatpush2.msra.mxu0 0.0
        %646 = vmatprep.subr.mxu0 0.0
        %647 = vmatpush2.msra.mxu0 0.0
        %648 = vmatprep.subr.mxu0 0.0
        %649 = vmatpush2.msra.mxu0 0.0
        %650 = vmatprep.subr.mxu0 0.0
        %651 = vmatpush2.msra.mxu0 0.0
        %652 = vmatprep.subr.mxu0 0.0
        %653 = vmatpush2.msra.mxu0 0.0
        %654 = vmatprep.subr.mxu0 0.0
        %655 = vmatpush2.msra.mxu0 0.0
        %656 = vmatprep.subr.mxu0 0.0
        %657 = vmatpush2.msra.mxu0 0.0
        %658 = vmatprep.subr.mxu0 0.0
        %659 = vmatpush2.msra.mxu0 0.0
        %660 = vmatprep.subr.mxu0 0.0
        %661 = vmatpush2.msra.mxu0 0.0
        %662 = vmatprep.subr.mxu0 0.0
        %663 = vmatpush2.msra.mxu0 0.0
        %664 = vmatprep.subr.mxu0 0.0
        %665 = vmatpush2.msra.mxu0 0.0
        %666 = vmatprep.mubr.f32.mxu0 0.0
        %667 = vmatmul.mubr.f32.gmra.mxu0 %v564
        %v668 = vpop.f32.mrf.mxu0
        %v669 = vadd.f32 %v560, %v668
        %v670 = vpop.f32.mrf.mxu0
        %671 = vmatprep.mubr.f32.mxu0 0.0
        %672 = vmatmul.mubr.f32.gmra.mxu0 %v567
        %v673 = vpop.f32.mrf.mxu0
        %v674 = vadd.f32 %v560, %v673
        %v675 = vpop.f32.mrf.mxu0
        %676 = vmatprep.mubr.f32.mxu0 0.0
        %677 = vmatmul.mubr.f32.gmra.mxu0 %v570
        %v678 = vpop.f32.mrf.mxu0
        %v679 = vadd.f32 %v560, %v678
        %v680 = vpop.f32.mrf.mxu0
        %681 = vmatprep.mubr.f32.mxu0 0.0
        %682 = vmatmul.mubr.f32.gmra.mxu0 %v573
        %v683 = vpop.f32.mrf.mxu0
        %v684 = vadd.f32 %v560, %v683
        %v685 = vpop.f32.mrf.mxu0
        %686 = vmatprep.mubr.f32.mxu0 0.0
        %687 = vmatmul.mubr.f32.gmra.mxu0 %v576
        %v688 = vpop.f32.mrf.mxu0
        %v689 = vadd.f32 %v560, %v688
        %v690 = vpop.f32.mrf.mxu0
        %691 = vmatprep.mubr.f32.mxu0 0.0
        %692 = vmatmul.mubr.f32.gmra.mxu0 %v579
        %v693 = vpop.f32.mrf.mxu0
        %v694 = vadd.f32 %v560, %v693
        %v695 = vpop.f32.mrf.mxu0
        %696 = vmatprep.mubr.f32.mxu0 0.0
        %697 = vmatmul.mubr.f32.gmra.mxu0 %v582
        %v698 = vpop.f32.mrf.mxu0
        %v699 = vadd.f32 %v560, %v698
        %v700 = vpop.f32.mrf.mxu0
        %701 = vmatprep.mubr.f32.mxu0 0.0
        %702 = vmatmul.mubr.f32.gmra.mxu0 %v585
        %v703 = vpop.f32.mrf.mxu0
        %v704 = vadd.f32 %v560, %v703
        %v705 = vpop.f32.mrf.mxu0
        %706 = vmatprep.mubr.f32.mxu0 0.0
        %707 = vmatmul.mubr.f32.gmra.mxu0 %v588
        %v708 = vpop.f32.mrf.mxu0
        %v709 = vadd.f32 %v560, %v708
        %v710 = vpop.f32.mrf.mxu0
        %711 = vmatprep.mubr.f32.mxu0 0.0
        %712 = vmatmul.mubr.f32.gmra.mxu0 %v591
        %v713 = vpop.f32.mrf.mxu0
        %v714 = vadd.f32 %v560, %v713
        %v715 = vpop.f32.mrf.mxu0
        %716 = vmatprep.mubr.f32.mxu0 0.0
        %717 = vmatmul.mubr.f32.gmra.mxu0 %v594
        %v718 = vpop.f32.mrf.mxu0
        %v719 = vadd.f32 %v560, %v718
        %v720 = vpop.f32.mrf.mxu0
        %721 = vmatprep.mubr.f32.mxu0 0.0
        %722 = vmatmul.mubr.f32.gmra.mxu0 %v597
        %v723 = vpop.f32.mrf.mxu0
        %v724 = vadd.f32 %v560, %v723
        %v725 = vpop.f32.mrf.mxu0
        %726 = vmatprep.mubr.f32.mxu0 0.0
        %727 = vmatmul.mubr.f32.gmra.mxu0 %v600
        %v728 = vpop.f32.mrf.mxu0
        %v729 = vadd.f32 %v560, %v728
        %v730 = vpop.f32.mrf.mxu0
        %731 = vdwg.mxu0
        %v732 = vmax.f32 %v669, 0.0
        %v733 = vmax.f32 %v674, 0.0
        %v734 = vmax.f32 %v679, 0.0
        %v735 = vmax.f32 %v684, 0.0
        %v736 = vmax.f32 %v689, 0.0
        %v737 = vmax.f32 %v694, 0.0
        %v738 = vmax.f32 %v699, 0.0
        %v739 = vmax.f32 %v704, 0.0
        %v740 = vmax.f32 %v709, 0.0
        %v741 = vmax.f32 %v714, 0.0
        %v742 = vmax.f32 %v719, 0.0
        %v743 = vmax.f32 %v724, 0.0
        %v744 = vmax.f32 %v729, 0.0
        %v745 = vld [vmem:[%s5] sm:$0xff]
        %v746 = vld [vmem:[%s5 + $0x8] sm:$0xff]
        %v747 = vld [vmem:[%s5 + $0x10] sm:$0xff]
        %v748 = vld [vmem:[%s5 + $0x18] sm:$0xff]
        %v749 = vld [vmem:[%s5 + $0x20] sm:$0xff]
        %v750 = vld [vmem:[%s5 + $0x28] sm:$0xff]
        %v751 = vld [vmem:[%s5 + $0x30] sm:$0xff]
        %v752 = vld [vmem:[%s5 + $0x38] sm:$0xff]
        %v753 = vld [vmem:[%s6] sm:$0x1]
        %v755 = vlaneseq
        %v756 = vshrl.u32 %v755, 7
        %v757 = vsub.s32 0, %v756
        %v758 = vrot.slane %v753, %v757
        %v761 = vsel %vm562, %v732, 0
        %v764 = vsel %vm562, %v733, 0
        %v767 = vsel %vm562, %v734, 0
        %v770 = vsel %vm562, %v735, 0
        %v773 = vsel %vm562, %v736, 0
        %v776 = vsel %vm562, %v737, 0
        %v779 = vsel %vm562, %v738, 0
        %v782 = vsel %vm562, %v739, 0
        %v785 = vsel %vm562, %v740, 0
        %v788 = vsel %vm562, %v741, 0
        %v791 = vsel %vm562, %v742, 0
        %v794 = vsel %vm562, %v743, 0
        %v797 = vsel %vm562, %v744, 0
        %799 = vmatprep.subr.mxu0 0.0
        %800 = vmatpush1.msra.mxu0 0.0
        %801 = vmatprep.subr.mxu0 0.0
        %802 = vmatpush1.msra.mxu0 0.0
        %803 = vmatprep.subr.mxu0 0.0
        %804 = vmatpush1.msra.mxu0 0.0
        %805 = vmatprep.subr.mxu0 0.0
        %806 = vmatpush1.msra.mxu0 0.0
        %807 = vmatprep.subr.mxu0 0.0
        %808 = vmatpush1.msra.mxu0 0.0
        %809 = vmatprep.subr.mxu0 0.0
        %810 = vmatpush1.msra.mxu0 0.0
        %811 = vmatprep.subr.mxu0 0.0
        %812 = vmatpush1.msra.mxu0 0.0
        %813 = vmatprep.subr.mxu0 0.0
        %814 = vmatpush1.msra.mxu0 0.0
        %815 = vmatprep.subr.mxu0 0.0
        %816 = vmatpush1.msra.mxu0 %v752
        %817 = vmatprep.subr.mxu0 0.0
        %818 = vmatpush1.msra.mxu0 %v751
        %819 = vmatprep.subr.mxu0 0.0
        %820 = vmatpush1.msra.mxu0 %v750
        %821 = vmatprep.subr.mxu0 0.0
        %822 = vmatpush1.msra.mxu0 %v749
        %823 = vmatprep.subr.mxu0 0.0
        %824 = vmatpush1.msra.mxu0 %v748
        %825 = vmatprep.subr.mxu0 0.0
        %826 = vmatpush1.msra.mxu0 %v747
        %827 = vmatprep.subr.mxu0 0.0
        %828 = vmatpush1.msra.mxu0 %v746
        %829 = vmatprep.subr.mxu0 0.0
        %830 = vmatpush1.msra.mxu0 %v745
        %831 = vmatprep.subr.mxu0 0.0
        %832 = vmatpush2.msra.mxu0 0.0
        %833 = vmatprep.subr.mxu0 0.0
        %834 = vmatpush2.msra.mxu0 0.0
        %835 = vmatprep.subr.mxu0 0.0
        %836 = vmatpush2.msra.mxu0 0.0
        %837 = vmatprep.subr.mxu0 0.0
        %838 = vmatpush2.msra.mxu0 0.0
        %839 = vmatprep.subr.mxu0 0.0
        %840 = vmatpush2.msra.mxu0 0.0
        %841 = vmatprep.subr.mxu0 0.0
        %842 = vmatpush2.msra.mxu0 0.0
        %843 = vmatprep.subr.mxu0 0.0
        %844 = vmatpush2.msra.mxu0 0.0
        %845 = vmatprep.subr.mxu0 0.0
        %846 = vmatpush2.msra.mxu0 0.0
        %847 = vmatprep.subr.mxu0 0.0
        %848 = vmatpush2.msra.mxu0 0.0
        %849 = vmatprep.subr.mxu0 0.0
        %850 = vmatpush2.msra.mxu0 0.0
        %851 = vmatprep.subr.mxu0 0.0
        %852 = vmatpush2.msra.mxu0 0.0
        %853 = vmatprep.subr.mxu0 0.0
        %854 = vmatpush2.msra.mxu0 0.0
        %855 = vmatprep.subr.mxu0 0.0
        %856 = vmatpush2.msra.mxu0 0.0
        %857 = vmatprep.subr.mxu0 0.0
        %858 = vmatpush2.msra.mxu0 0.0
        %859 = vmatprep.subr.mxu0 0.0
        %860 = vmatpush2.msra.mxu0 0.0
        %861 = vmatprep.subr.mxu0 0.0
        %862 = vmatpush2.msra.mxu0 0.0
        %863 = vmatprep.mubr.f32.mxu0 0.0
        %864 = vmatmul.mubr.f32.gmra.mxu0 %v761
        %v865 = vpop.f32.mrf.mxu0
        %v866 = vadd.f32 %v758, %v865
        %v867 = vpop.f32.mrf.mxu0
        %868 = vmatprep.mubr.f32.mxu0 0.0
        %869 = vmatmul.mubr.f32.gmra.mxu0 %v764
        %v870 = vpop.f32.mrf.mxu0
        %v871 = vadd.f32 %v758, %v870
        %v872 = vpop.f32.mrf.mxu0
        %873 = vmatprep.mubr.f32.mxu0 0.0
        %874 = vmatmul.mubr.f32.gmra.mxu0 %v767
        %v875 = vpop.f32.mrf.mxu0
        %v876 = vadd.f32 %v758, %v875
        %v877 = vpop.f32.mrf.mxu0
        %878 = vmatprep.mubr.f32.mxu0 0.0
        %879 = vmatmul.mubr.f32.gmra.mxu0 %v770
        %v880 = vpop.f32.mrf.mxu0
        %v881 = vadd.f32 %v758, %v880
        %v882 = vpop.f32.mrf.mxu0
        %883 = vmatprep.mubr.f32.mxu0 0.0
        %884 = vmatmul.mubr.f32.gmra.mxu0 %v773
        %v885 = vpop.f32.mrf.mxu0
        %v886 = vadd.f32 %v758, %v885
        %v887 = vpop.f32.mrf.mxu0
        %888 = vmatprep.mubr.f32.mxu0 0.0
        %889 = vmatmul.mubr.f32.gmra.mxu0 %v776
        %v890 = vpop.f32.mrf.mxu0
        %v891 = vadd.f32 %v758, %v890
        %v892 = vpop.f32.mrf.mxu0
        %893 = vmatprep.mubr.f32.mxu0 0.0
        %894 = vmatmul.mubr.f32.gmra.mxu0 %v779
        %v895 = vpop.f32.mrf.mxu0
        %v896 = vadd.f32 %v758, %v895
        %v897 = vpop.f32.mrf.mxu0
        %898 = vmatprep.mubr.f32.mxu0 0.0
        %899 = vmatmul.mubr.f32.gmra.mxu0 %v782
        %v900 = vpop.f32.mrf.mxu0
        %v901 = vadd.f32 %v758, %v900
        %v902 = vpop.f32.mrf.mxu0
        %903 = vmatprep.mubr.f32.mxu0 0.0
        %904 = vmatmul.mubr.f32.gmra.mxu0 %v785
        %v905 = vpop.f32.mrf.mxu0
        %v906 = vadd.f32 %v758, %v905
        %v907 = vpop.f32.mrf.mxu0
        %908 = vmatprep.mubr.f32.mxu0 0.0
        %909 = vmatmul.mubr.f32.gmra.mxu0 %v788
        %v910 = vpop.f32.mrf.mxu0
        %v911 = vadd.f32 %v758, %v910
        %v912 = vpop.f32.mrf.mxu0
        %913 = vmatprep.mubr.f32.mxu0 0.0
        %914 = vmatmul.mubr.f32.gmra.mxu0 %v791
        %v915 = vpop.f32.mrf.mxu0
        %v916 = vadd.f32 %v758, %v915
        %v917 = vpop.f32.mrf.mxu0
        %918 = vmatprep.mubr.f32.mxu0 0.0
        %919 = vmatmul.mubr.f32.gmra.mxu0 %v794
        %v920 = vpop.f32.mrf.mxu0
        %v921 = vadd.f32 %v758, %v920
        %v922 = vpop.f32.mrf.mxu0
        %923 = vmatprep.mubr.f32.mxu0 0.0
        %924 = vmatmul.mubr.f32.gmra.mxu0 %v797
        %v925 = vpop.f32.mrf.mxu0
        %v926 = vadd.f32 %v758, %v925
        %v927 = vpop.f32.mrf.mxu0
        %928 = vdwg.mxu0
        %vm929 = vcmask 23552
        %930 = vst.msk [vmem:[%s285] sm:$0xff] %vm929, %v866
        %931 = vst.msk [vmem:[%s285 + $0x8] sm:$0xff] %vm929, %v871
        %932 = vst.msk [vmem:[%s285 + $0x10] sm:$0xff] %vm929, %v876
        %933 = vst.msk [vmem:[%s285 + $0x18] sm:$0xff] %vm929, %v881
        %934 = vst.msk [vmem:[%s285 + $0x20] sm:$0xff] %vm929, %v886
        %935 = vst.msk [vmem:[%s285 + $0x28] sm:$0xff] %vm929, %v891
        %936 = vst.msk [vmem:[%s285 + $0x30] sm:$0xff] %vm929, %v896
        %937 = vst.msk [vmem:[%s285 + $0x38] sm:$0xff] %vm929, %v901
        %938 = vst.msk [vmem:[%s285 + $0x40] sm:$0xff] %vm929, %v906
        %939 = vst.msk [vmem:[%s285 + $0x48] sm:$0xff] %vm929, %v911
        %940 = vst.msk [vmem:[%s285 + $0x50] sm:$0xff] %vm929, %v916
        %941 = vst.msk [vmem:[%s285 + $0x58] sm:$0xff] %vm929, %v921
        %942 = vst.msk [vmem:[%s285 + $0x60] sm:$0xff] %vm929, %v926
        %s943 = sand.u32 %s178, 1
        %s944 = sand.u32 %s178, 1
        %s945 = smul.addr %s944, 104
        %s946 = scalar_lea.vmem [#allocation2], %s945
        // Predicated region
        $region49: #{tpu_custom_call.1} parent=47 // pred_check
          %p947 = pneg %p188
        $region50: #{tpu_custom_call.1} parent=47 // pred_check_branch
          %949 = sbr.rel (%p947) target = $region52
        $region51: #{tpu_custom_call.1} parent=47 // pred_region
          %s950 = smul.u32 13, %s18
          %s951 = ssub.s32 25, %s950
          %p952 = scmp.lt.s32.totalorder %s951, 13
          %s953 = scalar_select %p952, %s951, 13
          %s954 = smul.u32 128, %s953
          %p955 = scmp.ne.s32.totalorder 0, %s954
          %s956 = smul.addr %s950, 8
          %s957 = scalar_lea.vmem %s7, %s956
          // Predicated region
          $region53: #{tpu_custom_call.1} parent=51 // pred_check
            %p958 = pneg %p955
          $region54: #{tpu_custom_call.1} parent=51 // pred_check_branch
            %960 = sbr.rel (%p958) target = $region56
          $region55: #{tpu_custom_call.1} parent=51 // pred_region
            // Predicated region
            $region57: #{tpu_custom_call.1} parent=55 // pred_check
              _
            $region58: #{tpu_custom_call.1} parent=55 // pred_check_branch
              %962 = sbr.rel (0) target = $region60
            $region59: #{tpu_custom_call.1} parent=55 // pred_region
              // Predicated region
              $region79: #{tpu_custom_call.1} parent=59 // pred_check
                _
              $region80: #{tpu_custom_call.1} parent=59 // pred_check_branch
                %1037 = sbr.rel (0) target = $region82
              $region81: #{tpu_custom_call.1} parent=59 // pred_region
                %s1038 = sdiv.u32.pop %s953, 13
                %s1039 = srem.u32.pop %s953, 13
                // While loop
                $region83: #{tpu_custom_call.1} parent=81 // loop_pre_header
                  _
                $region84: #{tpu_custom_call.1} parent=81 // loop_header
                  %s1041 = sphi 0, %s1043
                  %p1042 = scmp.ge.s32.totalorder %s1041, %s1038
                  %s1046 = sphi 0, %s1077
                  %s1047 = sphi %s946, %s1080
                  %s1048 = sphi %s957, %s1081
                $region85: #{tpu_custom_call.1} parent=81 // loop_header_branch
                  %1045 = sbr.rel (%p1042) target = $region89
                $region86: #{tpu_custom_call.1} parent=81 // loop_body
                  %v1049 = vld [vmem:[%s1047] sm:$0xff]
                  %1050 = vst [vmem:[%s1048] sm:$0xff] %v1049
                  %v1051 = vld [vmem:[%s1047 + $0x8] sm:$0xff]
                  %1052 = vst [vmem:[%s1048 + $0x8] sm:$0xff] %v1051
                  %v1053 = vld [vmem:[%s1047 + $0x10] sm:$0xff]
                  %1054 = vst [vmem:[%s1048 + $0x10] sm:$0xff] %v1053
                  %v1055 = vld [vmem:[%s1047 + $0x18] sm:$0xff]
                  %1056 = vst [vmem:[%s1048 + $0x18] sm:$0xff] %v1055
                  %v1057 = vld [vmem:[%s1047 + $0x20] sm:$0xff]
                  %1058 = vst [vmem:[%s1048 + $0x20] sm:$0xff] %v1057
                  %v1059 = vld [vmem:[%s1047 + $0x28] sm:$0xff]
                  %1060 = vst [vmem:[%s1048 + $0x28] sm:$0xff] %v1059
                  %v1061 = vld [vmem:[%s1047 + $0x30] sm:$0xff]
                  %1062 = vst [vmem:[%s1048 + $0x30] sm:$0xff] %v1061
                  %v1063 = vld [vmem:[%s1047 + $0x38] sm:$0xff]
                  %1064 = vst [vmem:[%s1048 + $0x38] sm:$0xff] %v1063
                  %v1065 = vld [vmem:[%s1047 + $0x40] sm:$0xff]
                  %1066 = vst [vmem:[%s1048 + $0x40] sm:$0xff] %v1065
                  %v1067 = vld [vmem:[%s1047 + $0x48] sm:$0xff]
                  %1068 = vst [vmem:[%s1048 + $0x48] sm:$0xff] %v1067
                  %v1069 = vld [vmem:[%s1047 + $0x50] sm:$0xff]
                  %1070 = vst [vmem:[%s1048 + $0x50] sm:$0xff] %v1069
                  %v1071 = vld [vmem:[%s1047 + $0x58] sm:$0xff]
                  %1072 = vst [vmem:[%s1048 + $0x58] sm:$0xff] %v1071
                  %v1073 = vld [vmem:[%s1047 + $0x60] sm:$0xff]
                  %1074 = vst [vmem:[%s1048 + $0x60] sm:$0xff] %v1073
                  %s1075 = sadd.s32 1, %s1046
                  %p1076 = scmp.ge.s32.totalorder %s1075, %s1038
                  %s1077 = scalar_select %p1076, 0, %s1075
                  %s1078 = smul.u32 %s1077, 104
                  %s1079 = smul.u32 %s1077, 104
                  %s1080 = scalar_lea.vmem %s946, %s1078 [#allocation2]
                  %s1081 = scalar_lea.vmem %s957, %s1079
                $region87: #{tpu_custom_call.1} parent=81 // loop_footer
                  %s1043 = sadd.s32 %s1041, 1
                $region88: #{tpu_custom_call.1} parent=81 // loop_footer_branch
                  %1040 = sbr.rel target = $region84
                $region89: #{tpu_custom_call.1} parent=81 // loop_exit
                  _
                %s1082 = sdiv.u32.pop %s953, 13
                %s1083 = srem.u32.pop %s953, 13
                %s1084 = smul.u32 %s1082, 13
                %s1085 = smul.u32 8, %s1084
                %s1086 = scalar_lea.vmem %s946, %s1085 [#allocation2]
                %s1087 = smul.u32 8, %s1084
                %s1088 = scalar_lea.vmem %s957, %s1087
                // While loop
                $region90: #{tpu_custom_call.1} parent=81 // loop_pre_header
                  _
                $region91: #{tpu_custom_call.1} parent=81 // loop_header
                  %s1090 = sphi 0, %s1092
                  %p1091 = scmp.ge.s32.totalorder %s1090, %s1083
                  %s1095 = sphi 0, %s1102
                  %s1096 = sphi %s1086, %s1105
                  %s1097 = sphi %s1088, %s1106
                $region92: #{tpu_custom_call.1} parent=81 // loop_header_branch
                  %1094 = sbr.rel (%p1091) target = $region96
                $region93: #{tpu_custom_call.1} parent=81 // loop_body
                  %v1098 = vld [vmem:[%s1096] sm:$0xff]
                  %1099 = vst [vmem:[%s1097] sm:$0xff] %v1098
                  %s1100 = sadd.s32 1, %s1095
                  %p1101 = scmp.ge.s32.totalorder %s1100, %s1083
                  %s1102 = scalar_select %p1101, 0, %s1100
                  %s1103 = smul.u32 %s1102, 8
                  %s1104 = smul.u32 %s1102, 8
                  %s1105 = scalar_lea.vmem %s1086, %s1103 [#allocation2]
                  %s1106 = scalar_lea.vmem %s1088, %s1104
                $region94: #{tpu_custom_call.1} parent=81 // loop_footer
                  %s1092 = sadd.s32 %s1090, 1
                $region95: #{tpu_custom_call.1} parent=81 // loop_footer_branch
                  %1089 = sbr.rel target = $region91
                $region96: #{tpu_custom_call.1} parent=81 // loop_exit
                  _
              $region82: #{tpu_custom_call.1} parent=59 // pred_fallthru
                _
              // Predicated region
              $region97: #{tpu_custom_call.1} parent=59 // pred_check
                _
              $region98: #{tpu_custom_call.1} parent=59 // pred_check_branch
                %1108 = sbr.rel target = $region100
              $region99: #{tpu_custom_call.1} parent=59 // pred_region
                _
              $region100: #{tpu_custom_call.1} parent=59 // pred_fallthru
                _
            $region60: #{tpu_custom_call.1} parent=55 // pred_fallthru
              _
            // Predicated region
            $region61: #{tpu_custom_call.1} parent=55 // pred_check
              _
            $region62: #{tpu_custom_call.1} parent=55 // pred_check_branch
              %964 = sbr.rel target = $region64
            $region63: #{tpu_custom_call.1} parent=55 // pred_region
              %s966 = ssub.s32 256, 1
              %s967 = sdiv.u32.pop %s953, 13
              %s968 = srem.u32.pop %s953, 13
              // While loop
              $region65: #{tpu_custom_call.1} parent=63 // loop_pre_header
                _
              $region66: #{tpu_custom_call.1} parent=63 // loop_header
                %s970 = sphi 0, %s972
                %p971 = scmp.ge.s32.totalorder %s970, %s967
                %s975 = sphi 0, %s1006
                %s976 = sphi %s946, %s1009
                %s977 = sphi %s957, %s1010
              $region67: #{tpu_custom_call.1} parent=63 // loop_header_branch
                %974 = sbr.rel (%p971) target = $region71
              $region68: #{tpu_custom_call.1} parent=63 // loop_body
                %v978 = vld [vmem:[%s976] sm:%s966]
                %979 = vst [vmem:[%s977] sm:%s966] %v978
                %v980 = vld [vmem:[%s976 + $0x8] sm:%s966]
                %981 = vst [vmem:[%s977 + $0x8] sm:%s966] %v980
                %v982 = vld [vmem:[%s976 + $0x10] sm:%s966]
                %983 = vst [vmem:[%s977 + $0x10] sm:%s966] %v982
                %v984 = vld [vmem:[%s976 + $0x18] sm:%s966]
                %985 = vst [vmem:[%s977 + $0x18] sm:%s966] %v984
                %v986 = vld [vmem:[%s976 + $0x20] sm:%s966]
                %987 = vst [vmem:[%s977 + $0x20] sm:%s966] %v986
                %v988 = vld [vmem:[%s976 + $0x28] sm:%s966]
                %989 = vst [vmem:[%s977 + $0x28] sm:%s966] %v988
                %v990 = vld [vmem:[%s976 + $0x30] sm:%s966]
                %991 = vst [vmem:[%s977 + $0x30] sm:%s966] %v990
                %v992 = vld [vmem:[%s976 + $0x38] sm:%s966]
                %993 = vst [vmem:[%s977 + $0x38] sm:%s966] %v992
                %v994 = vld [vmem:[%s976 + $0x40] sm:%s966]
                %995 = vst [vmem:[%s977 + $0x40] sm:%s966] %v994
                %v996 = vld [vmem:[%s976 + $0x48] sm:%s966]
                %997 = vst [vmem:[%s977 + $0x48] sm:%s966] %v996
                %v998 = vld [vmem:[%s976 + $0x50] sm:%s966]
                %999 = vst [vmem:[%s977 + $0x50] sm:%s966] %v998
                %v1000 = vld [vmem:[%s976 + $0x58] sm:%s966]
                %1001 = vst [vmem:[%s977 + $0x58] sm:%s966] %v1000
                %v1002 = vld [vmem:[%s976 + $0x60] sm:%s966]
                %1003 = vst [vmem:[%s977 + $0x60] sm:%s966] %v1002
                %s1004 = sadd.s32 1, %s975
                %p1005 = scmp.ge.s32.totalorder %s1004, %s967
                %s1006 = scalar_select %p1005, 0, %s1004
                %s1007 = smul.u32 %s1006, 104
                %s1008 = smul.u32 %s1006, 104
                %s1009 = scalar_lea.vmem %s946, %s1007 [#allocation2]
                %s1010 = scalar_lea.vmem %s957, %s1008
              $region69: #{tpu_custom_call.1} parent=63 // loop_footer
                %s972 = sadd.s32 %s970, 1
              $region70: #{tpu_custom_call.1} parent=63 // loop_footer_branch
                %969 = sbr.rel target = $region66
              $region71: #{tpu_custom_call.1} parent=63 // loop_exit
                _
              %s1011 = sdiv.u32.pop %s953, 13
              %s1012 = srem.u32.pop %s953, 13
              %s1013 = smul.u32 %s1011, 13
              %s1014 = smul.u32 8, %s1013
              %s1015 = scalar_lea.vmem %s946, %s1014 [#allocation2]
              %s1016 = smul.u32 8, %s1013
              %s1017 = scalar_lea.vmem %s957, %s1016
              // While loop
              $region72: #{tpu_custom_call.1} parent=63 // loop_pre_header
                _
              $region73: #{tpu_custom_call.1} parent=63 // loop_header
                %s1019 = sphi 0, %s1021
                %p1020 = scmp.ge.s32.totalorder %s1019, %s1012
                %s1024 = sphi 0, %s1031
                %s1025 = sphi %s1015, %s1034
                %s1026 = sphi %s1017, %s1035
              $region74: #{tpu_custom_call.1} parent=63 // loop_header_branch
                %1023 = sbr.rel (%p1020) target = $region78
              $region75: #{tpu_custom_call.1} parent=63 // loop_body
                %v1027 = vld [vmem:[%s1025] sm:%s966]
                %1028 = vst [vmem:[%s1026] sm:%s966] %v1027
                %s1029 = sadd.s32 1, %s1024
                %p1030 = scmp.ge.s32.totalorder %s1029, %s1012
                %s1031 = scalar_select %p1030, 0, %s1029
                %s1032 = smul.u32 %s1031, 8
                %s1033 = smul.u32 %s1031, 8
                %s1034 = scalar_lea.vmem %s1015, %s1032 [#allocation2]
                %s1035 = scalar_lea.vmem %s1017, %s1033
              $region76: #{tpu_custom_call.1} parent=63 // loop_footer
                %s1021 = sadd.s32 %s1019, 1
              $region77: #{tpu_custom_call.1} parent=63 // loop_footer_branch
                %1018 = sbr.rel target = $region73
              $region78: #{tpu_custom_call.1} parent=63 // loop_exit
                _
            $region64: #{tpu_custom_call.1} parent=55 // pred_fallthru
              _
          $region56: #{tpu_custom_call.1} parent=51 // pred_fallthru
            _
          %1109 = vnop
        $region52: #{tpu_custom_call.1} parent=47 // pred_fallthru
          _
      $region48: #{tpu_custom_call.1} parent=5 // pred_fallthru
        _
      %p1110 = scmp.le.s32.totalorder 2, %s13
      // Predicated region
      $region101: #{tpu_custom_call.1} parent=5 // pred_check
        %p1111 = pneg %p1110
      $region102: #{tpu_custom_call.1} parent=5 // pred_check_branch
        %1113 = sbr.rel (%p1111) target = $region104
      $region103: #{tpu_custom_call.1} parent=5 // pred_region
        %s1114 = ssub.s32 %s13, 2
        // Predicated region
        $region105: #{tpu_custom_call.1} parent=103 // pred_check
          %p1115 = pneg %p194
        $region106: #{tpu_custom_call.1} parent=103 // pred_check_branch
          %1117 = sbr.rel (%p1115) target = $region108
        $region107: #{tpu_custom_call.1} parent=103 // pred_region
          %s1118 = sand.u32 %s179, 1
          %s1119 = sand.u32 %s179, 1
          %s1120 = smul.addr %s1119, 104
          %s1121 = scalar_lea.vmem [#allocation2], %s1120
        $region108: #{tpu_custom_call.1} parent=103 // pred_fallthru
          _
      $region104: #{tpu_custom_call.1} parent=5 // pred_fallthru
        _
    $region6: #{tpu_custom_call.1} parent=1 // loop_footer
      %s17 = sadd.s32 1, %s13
    $region7: #{tpu_custom_call.1} parent=1 // loop_footer_branch
      %12 = sbr.rel target = $region3
    $region8: #{tpu_custom_call.1} parent=1 // loop_exit
      _

</llo_original>
